<compile_context>
chip_gen: v7x
topology: tpu7x:2x2x1
jax: 0.10.0
libtpu: 0.0.40
codegen_flags: <defaults>
</compile_context>

<pallas_src>
import functools

import jax
import jax.numpy as jnp
from jax.experimental import pallas as pl
from jax.experimental.pallas import tpu as pltpu

_LANES = 128


def _iou_loss_kernel(n_ref, *refs, loc_loss_type, has_weight, has_pos_mask,
                     block_rows):
    idx = 0
    pred_ref = refs[idx]; idx += 1
    target_ref = refs[idx]; idx += 1
    if has_weight:
        weight_ref = refs[idx]; idx += 1
    if has_pos_mask:
        pos_mask_ref = refs[idx]; idx += 1
    out_ref = refs[idx]

    p = pred_ref[...]     # (4, BR, 128) f32: [left, top, right, bottom]
    t = target_ref[...]   # (4, BR, 128) f32

    # Valid-lane mask built in-kernel (no extra HBM row for it).
    step = pl.program_id(0)
    base = step * (block_rows * _LANES)
    row_ids = jax.lax.broadcasted_iota(jnp.int32, (block_rows, _LANES), 0)
    col_ids = jax.lax.broadcasted_iota(jnp.int32, (block_rows, _LANES), 1)
    box_idx = base + row_ids * _LANES + col_ids
    valid = box_idx < n_ref[0]

    # Areas.
    target_area = (t[0] + t[2]) * (t[1] + t[3])
    pred_area = (p[0] + p[2]) * (p[1] + p[3])

    # Fused min/max over the whole packed coordinate block.
    mn = jnp.minimum(p, t)
    mx = jnp.maximum(p, t)
    w_intersect = mn[0] + mn[2]
    h_intersect = mn[3] + mn[1]
    g_w_intersect = mx[0] + mx[2]
    g_h_intersect = mx[3] + mx[1]

    ac_uion = g_w_intersect * g_h_intersect
    if has_pos_mask:
        ac_uion = ac_uion + 1.0 - pos_mask_ref[...]

    area_intersect = w_intersect * h_intersect
    area_union = target_area + pred_area - area_intersect

    ious = (area_intersect + 1.0) / (area_union + 1.0)

    if loc_loss_type == 'iou':
        losses = -jnp.log(ious)
    elif loc_loss_type == 'linear_iou':
        losses = 1.0 - ious
    elif loc_loss_type == 'giou':
        # Padded lanes have ac_uion == 0 when pos_mask is absent; guard them so
        # no NaN is produced (values on valid lanes are untouched).
        ac_safe = jnp.where(valid, ac_uion, 1.0)
        gious = ious - (ac_uion - area_union) / ac_safe
        losses = 1.0 - gious
    else:
        raise NotImplementedError(loc_loss_type)

    if has_weight:
        losses = losses * weight_ref[...]

    losses = jnp.where(valid, losses, 0.0)

    # Per-lane partial sums for this (independent) grid step; final tiny
    # reduction happens outside the kernel so the grid axis stays "parallel".
    out_ref[...] = jnp.sum(losses, axis=0, keepdims=True).reshape(1, 1, _LANES)


def iou_loss(pred, target, weight=None, pos_mask=None, loc_loss_type='iou',
             block_rows=512):
    """Pallas TPU implementation of IOULoss.forward. pred/target: (N, 4)."""
    if loc_loss_type not in ('iou', 'linear_iou', 'giou'):
        raise NotImplementedError(loc_loss_type)

    pred = jnp.asarray(pred, jnp.float32)
    target = jnp.asarray(target, jnp.float32)
    n = pred.shape[0]

    # Tiling: box axis packed as (R, 128) rows; BR rows per grid step.
    r = max(1, pl.cdiv(n, _LANES))
    br = max(8, min(block_rows, ((r + 7) // 8) * 8))
    g = pl.cdiv(r, br)
    r_pad = g * br
    n_pad = r_pad * _LANES

    has_weight = weight is not None
    has_pos_mask = pos_mask is not None

    def coord_tiles(x):                       # (N, 4) -> (4, R_pad, 128)
        xt = jnp.pad(x.T, ((0, 0), (0, n_pad - n)))
        return xt.reshape(4, r_pad, _LANES)

    def row_tiles(x):                         # (N,) -> (R_pad, 128)
        xr = jnp.pad(jnp.asarray(x, jnp.float32).reshape(-1), (0, n_pad - n))
        return xr.reshape(r_pad, _LANES)

    coord_spec = pl.BlockSpec((4, br, _LANES), lambda i, n_s: (0, i, 0))
    row_spec = pl.BlockSpec((br, _LANES), lambda i, n_s: (i, 0))

    inputs = [coord_tiles(pred), coord_tiles(target)]
    in_specs = [coord_spec, coord_spec]
    if has_weight:
        inputs.append(row_tiles(weight))
        in_specs.append(row_spec)
    if has_pos_mask:
        inputs.append(row_tiles(pos_mask))
        in_specs.append(row_spec)

    kernel = functools.partial(
        _iou_loss_kernel,
        loc_loss_type=loc_loss_type,
        has_weight=has_weight,
        has_pos_mask=has_pos_mask,
        block_rows=br,
    )

    partials = pl.pallas_call(
        kernel,
        out_shape=jax.ShapeDtypeStruct((g, 1, _LANES), jnp.float32),
        grid_spec=pltpu.PrefetchScalarGridSpec(
            num_scalar_prefetch=1,
            grid=(g,),
            in_specs=in_specs,
            out_specs=pl.BlockSpec((1, 1, _LANES), lambda i, n_s: (i, 0, 0)),
        ),
        compiler_params=pltpu.CompilerParams(
            dimension_semantics=("parallel",)),
    )(jnp.array([n], jnp.int32), *inputs)

    # Tiny final reduction over per-step / per-lane partial sums.
    return jnp.sum(partials)


def _reference(pred, target, weight=None, pos_mask=None, loc_loss_type='iou'):
    pred = jnp.asarray(pred, jnp.float32)
    target = jnp.asarray(target, jnp.float32)
    pl_, pt_, pr_, pb_ = pred[:, 0], pred[:, 1], pred[:, 2], pred[:, 3]
    tl_, tt_, tr_, tb_ = target[:, 0], target[:, 1], target[:, 2], target[:, 3]
    ta = (tl_ + tr_) * (tt_ + tb_)
    pa = (pl_ + pr_) * (pt_ + pb_)
    wi = jnp.minimum(pl_, tl_) + jnp.minimum(pr_, tr_)
    hi = jnp.minimum(pb_, tb_) + jnp.minimum(pt_, tt_)
    gw = jnp.maximum(pl_, tl_) + jnp.maximum(pr_, tr_)
    gh = jnp.maximum(pb_, tb_) + jnp.maximum(pt_, tt_)
    ac = gw * gh
    if pos_mask is not None:
        ac = ac + 1.0 - jnp.asarray(pos_mask, jnp.float32)
    ai = wi * hi
    au = ta + pa - ai
    ious = (ai + 1.0) / (au + 1.0)
    gious = ious - (ac - au) / ac
    if loc_loss_type == 'iou':
        losses = -jnp.log(ious)
    elif loc_loss_type == 'linear_iou':
        losses = 1.0 - ious
    elif loc_loss_type == 'giou':
        losses = 1.0 - gious
    else:
        raise NotImplementedError
    if weight is not None:
        return jnp.sum(losses * jnp.asarray(weight, jnp.float32))
    return jnp.sum(losses)


if __name__ == "__main__":
    key = jax.random.PRNGKey(0)
    k1, k2, k3, k4 = jax.random.split(key, 4)

    # Small shapes: FCOS-style per-location distance regression, N = 8 boxes.
    N = 8
    pred = jax.random.uniform(k1, (N, 4), jnp.float32, minval=0.1, maxval=5.0)
    target = jax.random.uniform(k2, (N, 4), jnp.float32, minval=0.1, maxval=5.0)
    weight = jax.random.uniform(k3, (N,), jnp.float32, minval=0.0, maxval=1.0)
    pos_mask = (jax.random.uniform(k4, (N,), jnp.float32) > 0.5).astype(jnp.float32)

    cases = [
        ('iou', None, None),
        ('linear_iou', weight, None),
        ('giou', weight, None),
        ('giou', weight, pos_mask),
    ]
    for loss_type, w, pm in cases:
        out = jax.block_until_ready(
            iou_loss(pred, target, weight=w, pos_mask=pm, loc_loss_type=loss_type))
        ref = _reference(pred, target, weight=w, pos_mask=pm, loc_loss_type=loss_type)
        if not jnp.allclose(out, ref, rtol=1e-4, atol=1e-4):
            raise AssertionError(f"mismatch for {loss_type}: {out} vs {ref}")

    # Exercise the multi-step grid / partial-sum path with a small block size.
    Ng = 2000
    kg1, kg2, kg3 = jax.random.split(jax.random.PRNGKey(1), 3)
    pred_g = jax.random.uniform(kg1, (Ng, 4), jnp.float32, minval=0.1, maxval=5.0)
    target_g = jax.random.uniform(kg2, (Ng, 4), jnp.float32, minval=0.1, maxval=5.0)
    weight_g = jax.random.uniform(kg3, (Ng,), jnp.float32, minval=0.0, maxval=1.0)
    for loss_type in ('iou', 'linear_iou', 'giou'):
        out = jax.block_until_ready(
            iou_loss(pred_g, target_g, weight=weight_g,
                     loc_loss_type=loss_type, block_rows=8))
        ref = _reference(pred_g, target_g, weight=weight_g, loc_loss_type=loss_type)
        if not jnp.allclose(out, ref, rtol=1e-4, atol=1e-4):
            raise AssertionError(f"grid mismatch for {loss_type}: {out} vs {ref}")

    print("KERNEL_OK")
</pallas_src>

<mosaic_0001>
module attributes {stable_mosaic.version = 11 : i64} {
  func.func @_iou_loss_kernel(%arg0: i32, %arg1: memref<1xi32, #tpu.memory_space<smem>>, %arg2: memref<4x8x128xf32, #tpu.memory_space<vmem>>, %arg3: memref<4x8x128xf32, #tpu.memory_space<vmem>>, %arg4: memref<1x1x128xf32, #tpu.memory_space<vmem>>) attributes {dimension_semantics = [#tpu.dimension_semantics<parallel>], iteration_bounds = array<i64: 1>, scalar_prefetch = 1 : i64, scratch_operands = 0 : i64, tpu.core_type = #tpu.core_type<tc>, window_params = [{transform_indices = @transform_0, window_bounds = array<i64: 4, 8, 128>}, {transform_indices = @transform_1, window_bounds = array<i64: 4, 8, 128>}, {transform_indices = @transform_2, window_bounds = array<i64: 1, 1, 128>}]} {
    %c0 = arith.constant 0 : index
    %c0_0 = arith.constant 0 : index
    %c0_1 = arith.constant 0 : index
    %0 = vector.load %arg2[%c0, %c0_0, %c0_1] : memref<4x8x128xf32, #tpu.memory_space<vmem>>, vector<4x8x128xf32>
    %c0_2 = arith.constant 0 : index
    %c0_3 = arith.constant 0 : index
    %c0_4 = arith.constant 0 : index
    %1 = vector.load %arg3[%c0_2, %c0_3, %c0_4] : memref<4x8x128xf32, #tpu.memory_space<vmem>>, vector<4x8x128xf32>
    %c1024_i32 = arith.constant 1024 : i32
    %2 = arith.muli %arg0, %c1024_i32 : i32
    %3 = tpu.iota {dimensions = array<i32: 0>} : vector<8x128xi32>
    %4 = tpu.iota {dimensions = array<i32: 1>} : vector<8x128xi32>
    %c128_i32 = arith.constant 128 : i32
    %5 = vector.broadcast %c128_i32 : i32 to vector<8x128xi32>
    %6 = arith.muli %3, %5 : vector<8x128xi32>
    %7 = vector.broadcast %2 : i32 to vector<8x128xi32>
    %8 = arith.addi %7, %6 : vector<8x128xi32>
    %9 = arith.addi %8, %4 : vector<8x128xi32>
    %c0_5 = arith.constant 0 : index
    %10 = memref.load %arg1[%c0_5] : memref<1xi32, #tpu.memory_space<smem>>
    %11 = vector.broadcast %10 : i32 to vector<8x128xi32>
    %12 = arith.cmpi slt, %9, %11 : vector<8x128xi32>
    %13 = vector.extract_strided_slice %1 {offsets = [0, 0, 0], sizes = [1, 8, 128], strides = [1, 1, 1]} : vector<4x8x128xf32> to vector<1x8x128xf32>
    %14 = vector.shape_cast %13 : vector<1x8x128xf32> to vector<8x128xf32>
    %15 = vector.extract_strided_slice %1 {offsets = [2, 0, 0], sizes = [1, 8, 128], strides = [1, 1, 1]} : vector<4x8x128xf32> to vector<1x8x128xf32>
    %16 = vector.shape_cast %15 : vector<1x8x128xf32> to vector<8x128xf32>
    %17 = arith.addf %14, %16 : vector<8x128xf32>
    %18 = vector.extract_strided_slice %1 {offsets = [1, 0, 0], sizes = [1, 8, 128], strides = [1, 1, 1]} : vector<4x8x128xf32> to vector<1x8x128xf32>
    %19 = vector.shape_cast %18 : vector<1x8x128xf32> to vector<8x128xf32>
    %20 = vector.extract_strided_slice %1 {offsets = [3, 0, 0], sizes = [1, 8, 128], strides = [1, 1, 1]} : vector<4x8x128xf32> to vector<1x8x128xf32>
    %21 = vector.shape_cast %20 : vector<1x8x128xf32> to vector<8x128xf32>
    %22 = arith.addf %19, %21 : vector<8x128xf32>
    %23 = arith.mulf %17, %22 : vector<8x128xf32>
    %24 = vector.extract_strided_slice %0 {offsets = [0, 0, 0], sizes = [1, 8, 128], strides = [1, 1, 1]} : vector<4x8x128xf32> to vector<1x8x128xf32>
    %25 = vector.shape_cast %24 : vector<1x8x128xf32> to vector<8x128xf32>
    %26 = vector.extract_strided_slice %0 {offsets = [2, 0, 0], sizes = [1, 8, 128], strides = [1, 1, 1]} : vector<4x8x128xf32> to vector<1x8x128xf32>
    %27 = vector.shape_cast %26 : vector<1x8x128xf32> to vector<8x128xf32>
    %28 = arith.addf %25, %27 : vector<8x128xf32>
    %29 = vector.extract_strided_slice %0 {offsets = [1, 0, 0], sizes = [1, 8, 128], strides = [1, 1, 1]} : vector<4x8x128xf32> to vector<1x8x128xf32>
    %30 = vector.shape_cast %29 : vector<1x8x128xf32> to vector<8x128xf32>
    %31 = vector.extract_strided_slice %0 {offsets = [3, 0, 0], sizes = [1, 8, 128], strides = [1, 1, 1]} : vector<4x8x128xf32> to vector<1x8x128xf32>
    %32 = vector.shape_cast %31 : vector<1x8x128xf32> to vector<8x128xf32>
    %33 = arith.addf %30, %32 : vector<8x128xf32>
    %34 = arith.mulf %28, %33 : vector<8x128xf32>
    %35 = arith.minimumf %0, %1 : vector<4x8x128xf32>
    %36 = vector.extract_strided_slice %35 {offsets = [0, 0, 0], sizes = [1, 8, 128], strides = [1, 1, 1]} : vector<4x8x128xf32> to vector<1x8x128xf32>
    %37 = vector.shape_cast %36 : vector<1x8x128xf32> to vector<8x128xf32>
    %38 = vector.extract_strided_slice %35 {offsets = [2, 0, 0], sizes = [1, 8, 128], strides = [1, 1, 1]} : vector<4x8x128xf32> to vector<1x8x128xf32>
    %39 = vector.shape_cast %38 : vector<1x8x128xf32> to vector<8x128xf32>
    %40 = arith.addf %37, %39 : vector<8x128xf32>
    %41 = vector.extract_strided_slice %35 {offsets = [3, 0, 0], sizes = [1, 8, 128], strides = [1, 1, 1]} : vector<4x8x128xf32> to vector<1x8x128xf32>
    %42 = vector.shape_cast %41 : vector<1x8x128xf32> to vector<8x128xf32>
    %43 = vector.extract_strided_slice %35 {offsets = [1, 0, 0], sizes = [1, 8, 128], strides = [1, 1, 1]} : vector<4x8x128xf32> to vector<1x8x128xf32>
    %44 = vector.shape_cast %43 : vector<1x8x128xf32> to vector<8x128xf32>
    %45 = arith.addf %42, %44 : vector<8x128xf32>
    %46 = arith.mulf %40, %45 : vector<8x128xf32>
    %47 = arith.addf %23, %34 : vector<8x128xf32>
    %48 = arith.subf %47, %46 : vector<8x128xf32>
    %cst = arith.constant 1.000000e+00 : f32
    %49 = vector.broadcast %cst : f32 to vector<8x128xf32>
    %50 = arith.addf %46, %49 : vector<8x128xf32>
    %cst_6 = arith.constant 1.000000e+00 : f32
    %51 = vector.broadcast %cst_6 : f32 to vector<8x128xf32>
    %52 = arith.addf %48, %51 : vector<8x128xf32>
    %53 = arith.divf %50, %52 : vector<8x128xf32>
    %54 = math.log %53 : vector<8x128xf32>
    %cst_7 = arith.constant 0.000000e+00 : f32
    %55 = vector.broadcast %cst_7 : f32 to vector<8x128xf32>
    %56 = arith.subf %55, %54 : vector<8x128xf32>
    %cst_8 = arith.constant 0.000000e+00 : f32
    %57 = vector.broadcast %cst_8 : f32 to vector<8x128xf32>
    %58 = arith.select %12, %56, %57 : vector<8x128xi1>, vector<8x128xf32>
    %cst_9 = arith.constant dense<0.000000e+00> : vector<128xf32>
    %59 = vector.multi_reduction <add>, %58, %cst_9 [0] : vector<8x128xf32> to vector<128xf32>
    %60 = vector.shape_cast %59 : vector<128xf32> to vector<1x128xf32>
    %61 = vector.shape_cast %60 : vector<1x128xf32> to vector<1x1x128xf32>
    %c0_10 = arith.constant 0 : index
    %c0_11 = arith.constant 0 : index
    %c0_12 = arith.constant 0 : index
    %62 = vector.load %arg4[%c0_10, %c0_11, %c0_12] : memref<1x1x128xf32, #tpu.memory_space<vmem>>, vector<1x1x128xf32>
    tpu.vector_store %arg4[%c0_10, %c0_11, %c0_12], %61 {strides = array<i32>} : memref<1x1x128xf32, #tpu.memory_space<vmem>>, vector<1x1x128xf32>,
    return
  }
  func.func @transform_0(%arg0: i32, %arg1: memref<1xi32, #tpu.memory_space<smem>>) -> (i32, i32, i32) {
    %c0_i32 = arith.constant 0 : i32
    %c0_i32_0 = arith.constant 0 : i32
    %c0_i32_1 = arith.constant 0 : i32
    return %c0_i32, %arg0, %c0_i32_0 : i32, i32, i32
  }
  func.func @transform_1(%arg0: i32, %arg1: memref<1xi32, #tpu.memory_space<smem>>) -> (i32, i32, i32) {
    %c0_i32 = arith.constant 0 : i32
    %c0_i32_0 = arith.constant 0 : i32
    %c0_i32_1 = arith.constant 0 : i32
    return %c0_i32, %arg0, %c0_i32_0 : i32, i32, i32
  }
  func.func @transform_2(%arg0: i32, %arg1: memref<1xi32, #tpu.memory_space<smem>>) -> (i32, i32, i32) {
    %c0_i32 = arith.constant 0 : i32
    %c0_i32_0 = arith.constant 0 : i32
    %c0_i32_1 = arith.constant 0 : i32
    return %arg0, %c0_i32, %c0_i32_0 : i32, i32, i32
  }
}

</mosaic_0001>

<llo_original>
// kernel: tpu_custom_call.1
$region0: #{tpu_custom_call.1}
  #allocation0 [shape = 'u32[]', space=smem, size = 0x4, offset = 0x4, fixed_abs, tag = 'smem constant byte address 0x4 - core index']
  #allocation1 [shape = 'u32[144,128]{1,0:T(1,128)}', space=vmem, size = 0x12000, scoped, tag = 'internal scratch']
  #allocation2 [shape = 's32[1]{0}', space=sflag, size = 0x4, scoped, tag = 'scoped memory for tpu_custom_call.1']
  #allocation3 [shape = 's32[1]{0:T(128)S(6)}', space=smem, size = 0x200, scoped, tag = 'prefetched SMEM operand 0']
  %s0 = inlined_call_operand.<no memory space> [shape: s32[1], index: 0, kind: input, shape index: {}]
  %s1 = inlined_call_operand.hbm [shape: f32[4,8,128], index: 1, kind: input, shape index: {}]
  %s2 = inlined_call_operand.hbm [shape: f32[4,8,128], index: 2, kind: input, shape index: {}]
  %s3 = inlined_call_operand.hbm [shape: f32[1,1,128], index: 3, kind: output, shape index: {}]
  %s4 = sld [smem:[#allocation0]]
  $region26: #{tpu_custom_call.1} parent=0
    _
  %s6 = ssub.s32 1, %s4
  %s7 = scalar_select 0, %s6, %s4
  %8 = sst [smem:[#allocation3]] %s0
  $region1: #{tpu_custom_call.1} parent=0
    #allocation4 [shape = 'u8[16384]{0}', space=vmem, size = 0x4000, scoped, tag = 'input window, operand 1, single buffered']
    #allocation5 [shape = 's32[1]{0}', space=sflag, size = 0x4, scoped, tag = 'scoped memory for tpu_custom_call.1']
    #allocation6 [shape = 's32[1]{0}', space=sflag, size = 0x4, scoped, tag = 'scoped memory for tpu_custom_call.1']
    #allocation7 [shape = 'u8[16384]{0}', space=vmem, size = 0x4000, scoped, tag = 'input window, operand 2, single buffered']
    #allocation8 [shape = 's32[1]{0}', space=sflag, size = 0x4, scoped, tag = 'scoped memory for tpu_custom_call.1']
    #allocation9 [shape = 'u8[512]{0}', space=vmem, size = 0x400, scoped, tag = 'output window, operand 0, single buffered']
    %9 = vsyncpa [#allocation5], 0
    %10 = vsyncpa [#allocation8], 0
    %11 = vsyncpa [#allocation6], 0
    // Predicated region
    $region2: #{tpu_custom_call.1} parent=1 // pred_check
      _
    $region3: #{tpu_custom_call.1} parent=1 // pred_check_branch
      %13 = sbr.rel (0) target = $region5
    $region4: #{tpu_custom_call.1} parent=1 // pred_region
      %s15 = ssub.s32 512, 512
      %16 = vsyncadd [#allocation5], %s15
      %s17 = sshll.u32 [#allocation4], 4
      %s18 = int_to_ptr.vmem [resolvable:$true] %s17
      %23 = dma.hbm_to_vmem [thread:$0]  %s1, 512, %s18, [#allocation5], 128, 128, 8
    $region5: #{tpu_custom_call.1} parent=1 // pred_fallthru
      _
    // Predicated region
    $region6: #{tpu_custom_call.1} parent=1 // pred_check
      _
    $region7: #{tpu_custom_call.1} parent=1 // pred_check_branch
      %25 = sbr.rel (0) target = $region9
    $region8: #{tpu_custom_call.1} parent=1 // pred_region
      %s27 = ssub.s32 512, 512
      %28 = vsyncadd [#allocation8], %s27
      %s29 = sshll.u32 [#allocation7], 4
      %s30 = int_to_ptr.vmem [resolvable:$true] %s29
      %35 = dma.hbm_to_vmem [thread:$0]  %s2, 512, %s30, [#allocation8], 128, 128, 8
    $region9: #{tpu_custom_call.1} parent=1 // pred_fallthru
      _
    // Predicated region
    $region10: #{tpu_custom_call.1} parent=1 // pred_check
      _
    $region11: #{tpu_custom_call.1} parent=1 // pred_check_branch
      %37 = sbr.rel (0) target = $region13
    $region12: #{tpu_custom_call.1} parent=1 // pred_region
      %38 = dma.done [#allocation5], 512
    $region13: #{tpu_custom_call.1} parent=1 // pred_fallthru
      _
    // Predicated region
    $region14: #{tpu_custom_call.1} parent=1 // pred_check
      _
    $region15: #{tpu_custom_call.1} parent=1 // pred_check_branch
      %40 = sbr.rel (0) target = $region17
    $region16: #{tpu_custom_call.1} parent=1 // pred_region
      %41 = dma.done [#allocation8], 512
    $region17: #{tpu_custom_call.1} parent=1 // pred_fallthru
      _
    %v42 = vld [vmem:[#allocation4] sm:$0xff]
    %v43 = vld [vmem:[#allocation4 + $0x8] sm:$0xff]
    %v44 = vld [vmem:[#allocation4 + $0x10] sm:$0xff]
    %v45 = vld [vmem:[#allocation4 + $0x18] sm:$0xff]
    %v46 = vld [vmem:[#allocation7] sm:$0xff]
    %v47 = vld [vmem:[#allocation7 + $0x8] sm:$0xff]
    %v48 = vld [vmem:[#allocation7 + $0x10] sm:$0xff]
    %v49 = vld [vmem:[#allocation7 + $0x18] sm:$0xff]
    %s50 = smul.u32 0, 1024
    %v51 = vlaneseq
    %v52 = vshrl.u32 %v51, 7
    %v53 = vlaneseq
    %v54 = vand.u32 %v53, 127
    %v55 = vmul.u32 %v52, 128
    %v56 = vstv %s50
    %v57 = vadd.s32 %v56, %v55
    %v58 = vadd.s32 %v57, %v54
    %s59 = sld [smem:[#allocation3]]
    %v60 = vstv %s59
    %vm61 = vcmp.lt.s32.totalorder %v58, %v60
    %v62 = vadd.f32 %v46, %v48
    %v63 = vadd.f32 %v47, %v49
    %v64 = vmul.f32 %v62, %v63
    %v65 = vadd.f32 %v42, %v44
    %v66 = vadd.f32 %v43, %v45
    %v67 = vmul.f32 %v65, %v66
    %v68 = vmin.f32 %v42, %v46
    %v69 = vmin.f32 %v43, %v47
    %v70 = vmin.f32 %v44, %v48
    %v71 = vmin.f32 %v45, %v49
    %v72 = vadd.f32 %v68, %v70
    %v73 = vadd.f32 %v71, %v69
    %v74 = vmul.f32 %v72, %v73
    %v75 = vadd.f32 %v64, %v67
    %v76 = vsub.f32 %v75, %v74
    %v77 = vadd.f32 %v74, 1.0
    %v78 = vadd.f32 %v76, 1.0
    %v79 = vrcp.pop %v78
    %v80 = vmul.f32 %v77, %v79
    %v81 = vlog2.pop %v80
    %v82 = vmul.f32 %v81, 0.6931472
    %v83 = vsub.f32 0.0, %v82
    %v84 = vsel %vm61, %v83, 0.0
    %v85 = vrot.slane %v84, 4
    %v86 = vadd.f32 %v84, %v85
    %v87 = vrot.slane %v86, 2
    %v88 = vadd.f32 %v86, %v87
    %v89 = vrot.slane %v88, 1
    %v90 = vadd.f32 %v88, %v89
    %91 = vst [vmem:[#allocation9] sm:$0x1] %v90
    // Predicated region
    $region18: #{tpu_custom_call.1} parent=1 // pred_check
      _
    $region19: #{tpu_custom_call.1} parent=1 // pred_check_branch
      %93 = sbr.rel (0) target = $region21
    $region20: #{tpu_custom_call.1} parent=1 // pred_region
      %s95 = ssub.s32 16, 16
      %96 = vsyncadd [#allocation6], %s95
      %s98 = sshll.u32 [#allocation9], 4
      %s99 = int_to_ptr.vmem [resolvable:$true] %s98
      %101 = dma.vmem_to_hbm [thread:$0]  %s99, 16, %s3, [#allocation6]
    $region21: #{tpu_custom_call.1} parent=1 // pred_fallthru
      _
    // Predicated region
    $region22: #{tpu_custom_call.1} parent=1 // pred_check
      _
    $region23: #{tpu_custom_call.1} parent=1 // pred_check_branch
      %103 = sbr.rel (0) target = $region25
    $region24: #{tpu_custom_call.1} parent=1 // pred_region
      %104 = dma.done [#allocation6], 16
    $region25: #{tpu_custom_call.1} parent=1 // pred_fallthru
      _
    %105 = vsyncpa [#allocation5], 1
    %106 = vsyncpa [#allocation8], 1
    %107 = vsyncpa [#allocation6], 1

</llo_original>
